<compile_context>
chip_gen: v5e
topology: v5e:2x2
jax: 0.10.0
libtpu: 0.0.40
codegen_flags: <defaults>
</compile_context>

<pallas_src>
import math
import functools

import jax
import jax.numpy as jnp
from jax import lax
from jax.experimental import pallas as pl
from jax.experimental.pallas import tpu as pltpu
import numpy as np


def _pos_embed_kernel(base_ref, o_ref, *, C, D, temperature, tc, tile_in_one_half):
    # base_ref: (2, thw) f32 -- row 0: y_embed per flat position, row 1: x_embed.
    # o_ref:    (tc, thw)    -- one tile of the batch-invariant (C, H*W) slab.
    ci = pl.program_id(0)

    # Per-channel constants: a (tc, 1) column, computed once per tile.
    c = ci * tc + lax.broadcasted_iota(jnp.int32, (tc, 1), 0)
    is_y = c < D                                   # channels [0, D) -> y, [D, C) -> x
    k = jnp.where(is_y, c, c - D)                  # sub-index within each half
    k_f = k.astype(jnp.float32)
    # 1 / dim_t[k]  with dim_t[k] = temperature ** (2k / C)
    inv_dim_t = jnp.exp(k_f * (-2.0 * math.log(float(temperature)) / float(C)))
    # even k -> sin, odd k -> cos == sin(x + pi/2)
    phase_off = (k & 1).astype(jnp.float32) * (0.5 * math.pi)

    if tile_in_one_half:
        # tc divides D: this tile lies entirely in the y- or x-half, so just read
        # the single needed row (no (tc, thw) VPU select).
        half = (ci * tc) // D                      # scalar: 0 -> y row, 1 -> x row
        base = base_ref[pl.ds(half, 1), :]         # (1, thw); broadcasts below
    else:
        y_base = base_ref[0:1, :]                  # (1, thw)
        x_base = base_ref[1:2, :]                  # (1, thw)
        base = jnp.where(is_y, y_base, x_base)     # (tc, thw)

    o_ref[...] = jnp.sin(base * inv_dim_t + phase_off).astype(o_ref.dtype)


def _choose_tiles(C, HW, itemsize=4, budget_bytes=8 << 20):
    """Pick (tc, thw): largest legal blocks within ~budget_bytes.

    tc must be a multiple of 8 dividing C (or C itself); thw must be a multiple
    of 128 dividing HW (or the full HW).
    """
    c_cands = [d for d in range(8, C, 8) if C % d == 0] + [C]

    fitting = [d for d in c_cands if d * HW * itemsize <= budget_bytes]
    if fitting:
        tc = max(fitting)
        # Prefer >= 2 C tiles so the "parallel" axis can split across the two
        # v7x TensorCores; extra per-step overhead is negligible at multi-MiB blocks.
        smaller = [d for d in fitting if d <= C // 2]
        if tc == C and smaller:
            tc = max(smaller)
        return tc, HW

    # HW (lane-axis) tiling fallback for very large feature maps.
    tc = min(c_cands)
    hw_cands = [d for d in range(128, HW, 128) if HW % d == 0]
    hw_fitting = [d for d in hw_cands if tc * d * itemsize <= budget_bytes]
    if hw_fitting:
        return tc, max(hw_fitting)
    if hw_cands:
        return tc, min(hw_cands)
    # TODO(synk): pad HW to a multiple of 128 for huge HW with no 128-divisor.
    return tc, HW


def leveled_position_embedding_sine(x, feature_dim, temperature=10000):
    """Pallas implementation of LeveledPositionEmbeddingSine.forward."""
    if x.ndim != 4:
        raise ValueError(f"Expected 4D input (B,C,H,W), got shape: {x.shape}")
    B, C, H, W = x.shape
    if C != feature_dim:
        raise ValueError(
            f"Input has {C} channels but position encoding was initialized "
            f"for {feature_dim} channels")
    # The PyTorch stack/flatten requires C//2 to be even (C % 4 == 0).
    assert C % 4 == 0, "feature_dim must be divisible by 4 (as in the torch code)"

    HW = H * W
    D = C // 2
    tc, thw = _choose_tiles(C, HW)
    tile_in_one_half = (D % tc == 0)

    # Per-position normalized embeddings depend only on the static H, W:
    # flat index hw = h * W + w (row-major, matching contiguous NCHW).
    eps = np.float32(1e-6)
    two_pi = np.float32(2.0 * math.pi)
    y_row = (np.arange(1, H + 1, dtype=np.float32)
             / (np.float32(H) + eps)) * two_pi                         # (H,)
    x_row = (np.arange(1, W + 1, dtype=np.float32)
             / (np.float32(W) + eps)) * two_pi                         # (W,)
    base = np.stack([np.repeat(y_row, W), np.tile(x_row, H)], axis=0)  # (2, HW)
    base = jnp.asarray(base, dtype=jnp.float32)

    kernel = functools.partial(
        _pos_embed_kernel, C=C, D=D, temperature=float(temperature),
        tc=tc, tile_in_one_half=tile_in_one_half)

    # Double-buffered output block + double-buffered base block + headroom.
    vmem_limit = max(2 * tc * thw * 4 + 2 * 2 * thw * 4 + (4 << 20), 16 << 20)

    slab = pl.pallas_call(
        kernel,
        out_shape=jax.ShapeDtypeStruct((C, HW), jnp.float32),
        grid=(C // tc, HW // thw),
        in_specs=[pl.BlockSpec((2, thw), lambda ci, hi: (0, hi))],
        out_specs=pl.BlockSpec((tc, thw), lambda ci, hi: (ci, hi)),
        compiler_params=pltpu.CompilerParams(
            dimension_semantics=("parallel", "parallel"),
            vmem_limit_bytes=int(vmem_limit)),
    )(base)

    # The encoding is batch-invariant: broadcast to (B, C, H, W) instead of
    # writing B identical copies from the kernel.
    return jnp.broadcast_to(slab.reshape(1, C, H, W), (B, C, H, W))


def _reference_pos_embed(x, feature_dim, temperature=10000):
    """Pure-JAX transcription of the PyTorch forward, for verification."""
    B, C, H, W = x.shape
    not_mask = jnp.ones((B, H, W), jnp.float32)
    y_embed = jnp.cumsum(not_mask, axis=1)
    x_embed = jnp.cumsum(not_mask, axis=2)
    eps = 1e-6
    y_embed = y_embed / (y_embed[:, -1:, :] + eps) * 2 * math.pi
    x_embed = x_embed / (x_embed[:, :, -1:] + eps) * 2 * math.pi
    dim_t = jnp.arange(C // 2, dtype=jnp.float32)
    dim_t = float(temperature) ** (2 * dim_t / C)
    pos_x = x_embed[..., None] / dim_t
    pos_y = y_embed[..., None] / dim_t
    pos_x = jnp.stack(
        (jnp.sin(pos_x[..., 0::2]), jnp.cos(pos_x[..., 1::2])), axis=4
    ).reshape(B, H, W, -1)
    pos_y = jnp.stack(
        (jnp.sin(pos_y[..., 0::2]), jnp.cos(pos_y[..., 1::2])), axis=4
    ).reshape(B, H, W, -1)
    pos = jnp.concatenate((pos_y, pos_x), axis=3).transpose(0, 3, 1, 2)
    return pos


if __name__ == "__main__":
    key = jax.random.PRNGKey(0)

    # Config 1: small shapes consistent with the module (B=2, C=feature_dim=4, 16x16)
    #           -> single C tile spanning both halves (where path).
    # Config 2: exercises multi-tile C (two TC-parallel tiles, one-half path) and
    #           W not a multiple of 128 (full-HW lane block).
    configs = [(2, 4, 16, 16), (1, 32, 8, 20)]

    for (B, C, H, W) in configs:
        key, sub = jax.random.split(key)
        x = jax.random.normal(sub, (B, C, H, W), dtype=jnp.float32)

        pos = leveled_position_embedding_sine(x, feature_dim=C, temperature=10000)
        pos = jax.block_until_ready(pos)

        ref = _reference_pos_embed(x, feature_dim=C, temperature=10000)
        assert pos.shape == x.shape, f"{pos.shape} vs {x.shape}"
        np.testing.assert_allclose(
            np.asarray(pos), np.asarray(ref), atol=2e-5, rtol=2e-5)

    print("KERNEL_OK")
</pallas_src>

<mosaic_0001>
module attributes {stable_mosaic.version = 11 : i64} {
  func.func @_pos_embed_kernel(%arg0: i32, %arg1: i32, %arg2: memref<2x256xf32, #tpu.memory_space<vmem>>, %arg3: memref<4x256xf32, #tpu.memory_space<vmem>>) attributes {dimension_semantics = [#tpu.dimension_semantics<parallel>, #tpu.dimension_semantics<parallel>], iteration_bounds = array<i64: 1, 1>, scalar_prefetch = 0 : i64, scratch_operands = 0 : i64, tpu.core_type = #tpu.core_type<tc>, window_params = [{transform_indices = @transform_0, window_bounds = array<i64: 2, 256>}, {transform_indices = @transform_1, window_bounds = array<i64: 4, 256>}]} {
    %c4_i32 = arith.constant 4 : i32
    %0 = arith.muli %arg0, %c4_i32 : i32
    %1 = tpu.iota {dimensions = array<i32: 0>} : vector<4x1xi32>
    %2 = vector.broadcast %0 : i32 to vector<4x1xi32>
    %3 = arith.addi %2, %1 : vector<4x1xi32>
    %c2_i32 = arith.constant 2 : i32
    %4 = vector.broadcast %c2_i32 : i32 to vector<4x1xi32>
    %5 = arith.cmpi slt, %3, %4 : vector<4x1xi32>
    %c2_i32_0 = arith.constant 2 : i32
    %6 = vector.broadcast %c2_i32_0 : i32 to vector<4x1xi32>
    %7 = arith.subi %3, %6 : vector<4x1xi32>
    %8 = arith.select %5, %3, %7 : vector<4x1xi1>, vector<4x1xi32>
    %9 = arith.sitofp %8 : vector<4x1xi32> to vector<4x1xf32>
    %cst = arith.constant -4.60517025 : f32
    %10 = vector.broadcast %cst : f32 to vector<4x1xf32>
    %11 = arith.mulf %9, %10 : vector<4x1xf32>
    %12 = math.exp %11 : vector<4x1xf32>
    %c1_i32 = arith.constant 1 : i32
    %13 = vector.broadcast %c1_i32 : i32 to vector<4x1xi32>
    %14 = arith.andi %8, %13 : vector<4x1xi32>
    %15 = arith.sitofp %14 : vector<4x1xi32> to vector<4x1xf32>
    %cst_1 = arith.constant 1.57079637 : f32
    %16 = vector.broadcast %cst_1 : f32 to vector<4x1xf32>
    %17 = arith.mulf %15, %16 : vector<4x1xf32>
    %c0 = arith.constant 0 : index
    %c0_2 = arith.constant 0 : index
    %18 = vector.load %arg2[%c0, %c0_2] : memref<2x256xf32, #tpu.memory_space<vmem>>, vector<1x256xf32>
    %c1 = arith.constant 1 : index
    %c0_3 = arith.constant 0 : index
    %19 = vector.load %arg2[%c1, %c0_3] : memref<2x256xf32, #tpu.memory_space<vmem>>, vector<1x256xf32>
    %20 = vector.shape_cast %5 : vector<4x1xi1> to vector<4x1xi1>
    %21 = vector.broadcast %20 : vector<4x1xi1> to vector<4x256xi1>
    %22 = vector.shape_cast %18 : vector<1x256xf32> to vector<1x256xf32>
    %23 = vector.broadcast %22 : vector<1x256xf32> to vector<4x256xf32>
    %24 = vector.shape_cast %19 : vector<1x256xf32> to vector<1x256xf32>
    %25 = vector.broadcast %24 : vector<1x256xf32> to vector<4x256xf32>
    %26 = arith.select %21, %23, %25 : vector<4x256xi1>, vector<4x256xf32>
    %27 = vector.broadcast %12 : vector<4x1xf32> to vector<4x256xf32>
    %28 = arith.mulf %26, %27 : vector<4x256xf32>
    %29 = vector.broadcast %17 : vector<4x1xf32> to vector<4x256xf32>
    %30 = arith.addf %28, %29 : vector<4x256xf32>
    %31 = math.sin %30 : vector<4x256xf32>
    %c0_4 = arith.constant 0 : index
    %c0_5 = arith.constant 0 : index
    %32 = vector.load %arg3[%c0_4, %c0_5] : memref<4x256xf32, #tpu.memory_space<vmem>>, vector<4x256xf32>
    tpu.vector_store %arg3[%c0_4, %c0_5], %31 {strides = array<i32>} : memref<4x256xf32, #tpu.memory_space<vmem>>, vector<4x256xf32>,
    return
  }
  func.func @transform_0(%arg0: i32, %arg1: i32) -> (i32, i32) {
    %c0_i32 = arith.constant 0 : i32
    %c0_i32_0 = arith.constant 0 : i32
    return %c0_i32, %arg1 : i32, i32
  }
  func.func @transform_1(%arg0: i32, %arg1: i32) -> (i32, i32) {
    %c0_i32 = arith.constant 0 : i32
    return %arg0, %arg1 : i32, i32
  }
}

</mosaic_0001>

<llo_original>
// kernel: tpu_custom_call.1
$region0: #{tpu_custom_call.1}
  #allocation0 [shape = 'u32[]', space=smem, size = 0x4, offset = 0x4, fixed_abs, tag = 'smem constant byte address 0x4 - core index']
  #allocation1 [shape = 'u32[72,128]{1,0:T(1,128)}', space=vmem, size = 0x9000, scoped, tag = 'internal scratch']
  %s0 = inlined_call_operand.hbm [shape: f32[2,256], index: 0, kind: input, shape index: {}]
  %s1 = inlined_call_operand.hbm [shape: f32[4,256], index: 1, kind: output, shape index: {}]
  %s2 = sld [smem:[#allocation0]]
  $region18: #{tpu_custom_call.1} parent=0
    _
  %s4 = ssub.s32 1, %s2
  %s5 = scalar_select 0, %s4, %s2
  $region1: #{tpu_custom_call.1} parent=0
    #allocation2 [shape = 'u8[2048]{0}', space=vmem, size = 0x800, scoped, tag = 'input window, operand 0, single buffered']
    #allocation3 [shape = 's32[1]{0}', space=sflag, size = 0x4, scoped, tag = 'scoped memory for tpu_custom_call.1']
    #allocation4 [shape = 's32[1]{0}', space=sflag, size = 0x4, scoped, tag = 'scoped memory for tpu_custom_call.1']
    #allocation5 [shape = 'u8[4096]{0}', space=vmem, size = 0x1000, scoped, tag = 'output window, operand 0, single buffered']
    %6 = vsyncpa [#allocation3], 0
    %7 = vsyncpa [#allocation4], 0
    // Predicated region
    $region2: #{tpu_custom_call.1} parent=1 // pred_check
      _
    $region3: #{tpu_custom_call.1} parent=1 // pred_check_branch
      %9 = sbr.rel (0) target = $region5
    $region4: #{tpu_custom_call.1} parent=1 // pred_region
      %11 = vsyncadd [#allocation3], 0
      %s13 = sshll.u32 %s0, 4
      %s14 = int_to_ptr.hbm [resolvable:$true] %s13
      %s15 = sshll.u32 [#allocation2], 4
      %s16 = int_to_ptr.vmem [resolvable:$true] %s15
      %18 = dma.hbm_to_vmem [thread:$0]  %s14, 64, %s16, [#allocation3]
    $region5: #{tpu_custom_call.1} parent=1 // pred_fallthru
      _
    // Predicated region
    $region6: #{tpu_custom_call.1} parent=1 // pred_check
      _
    $region7: #{tpu_custom_call.1} parent=1 // pred_check_branch
      %20 = sbr.rel (0) target = $region9
    $region8: #{tpu_custom_call.1} parent=1 // pred_region
      %22 = dma.done [#allocation3], 64
    $region9: #{tpu_custom_call.1} parent=1 // pred_fallthru
      _
    %s23 = smul.u32 0, 4
    %v24 = vlaneseq
    %v25 = vshrl.u32 %v24, 7
    %v26 = vstv %s23
    %v27 = vadd.s32 %v26, %v25
    %vm28 = vcmp.lt.s32.totalorder %v27, 2
    %v29 = vsub.s32 %v27, 2
    %v30 = vsel %vm28, %v27, %v29
    %v31 = vcvt.s32.f32 %v30
    %v32 = vmul.f32 %v31, -4.6051702
    %v33 = vmul.f32 %v32, 1.442695
    %v34 = vpow.pop %v33
    %v35 = vand.u32 %v30, 1
    %v36 = vcvt.s32.f32 %v35
    %v37 = vmul.f32 %v36, 1.5707964
    %v38 = vld [vmem:[#allocation2] ss:$2 sm:$0x3]
    %s39 = scalar_lea.vmem [#allocation2], 1
    %v40 = vld [vmem:[%s39] ss:$2 sm:$0x3]
    %v41 = vsel %vm28, 1, 0
    %vm42 = vcmp.eq.s32.totalorder %v41, 1
    %v44 = vperm.slane %v38, 0
    %v45 = vperm.slane %v38, 1
    %v49 = vperm.slane %v40, 0
    %v50 = vperm.slane %v40, 1
    %v53 = vsel %vm42, %v44, %v49
    %v54 = vsel %vm42, %v45, %v50
    %v55 = vmul.f32 %v53, %v34
    %v56 = vmul.f32 %v54, %v34
    %v57 = vadd.f32 %v55, %v37
    %v58 = vadd.f32 %v56, %v37
    %v59 = vand.u32 2147483647, %v57
    %vm60 = vcmp.le.f32.partialorder %v59, 0.7853982
    %vm61 = vcmp.lt.s32.totalorder %v57, 0
    %v62 = vand.u32 %v57, 2139095040
    %v63 = vshrl.u32 %v62, 23
    %v64 = vsub.s32 %v63, 127
    %v65 = vand.u32 2147483647, %v57
    %v66 = vand.u32 %v65, 8388607
    %v67 = vor.u32 %v66, 8388608
    %v68 = vsub.s32 0, %v67
    %v69 = vadd.s32 %v64, 1
    %vm70 = vcmp.gt.s32.totalorder %v69, 0
    %v71 = vsel %vm70, %v69, 0
    %v72 = vshrl.u32 %v71, 5
    %v73 = vand.u32 %v71, 31
    %v74 = vsub.s32 32, %v73
    %v75 = vshrl.u32 683565275, %v74
    %v76 = vshll.u32 683565275, %v73
    %v77 = vshrl.u32 2475754826, %v74
    %v78 = vor.u32 %v76, %v77
    %v79 = vshll.u32 2475754826, %v73
    %v80 = vshrl.u32 2131351028, %v74
    %v81 = vor.u32 %v79, %v80
    %v82 = vshll.u32 2131351028, %v73
    %v83 = vshrl.u32 2102212464, %v74
    %v84 = vor.u32 %v82, %v83
    %v85 = vshll.u32 2102212464, %v73
    %v86 = vshrl.u32 920167782, %v74
    %v87 = vor.u32 %v85, %v86
    %v88 = vshll.u32 920167782, %v73
    %v89 = vshrl.u32 1326507024, %v74
    %v90 = vor.u32 %v88, %v89
    %vm91 = vcmp.lt.s32.totalorder %v72, 1
    %vm92 = vcmp.lt.s32.totalorder %v72, 2
    %vm93 = vcmp.lt.s32.totalorder %v72, 3
    %vm94 = vcmp.lt.s32.totalorder %v72, 4
    %v95 = vsel %vm91, %v75, %v78
    %v96 = vsel %vm94, %v84, 2102212464
    %v97 = vsel %vm93, %v81, %v96
    %v98 = vsel %vm92, %v95, %v97
    %v99 = vsel %vm91, %v78, %v81
    %v100 = vsel %vm94, %v87, 920167782
    %v101 = vsel %vm93, %v84, %v100
    %v102 = vsel %vm92, %v99, %v101
    %v103 = vsel %vm91, %v81, %v84
    %v104 = vsel %vm94, %v90, 1326507024
    %v105 = vsel %vm93, %v87, %v104
    %v106 = vsel %vm92, %v103, %v105
    %v107 = vshll.u32 %v67, 8
    %v108 = vand.u32 %v107, 65535
    %v109 = vshrl.u32 %v107, 16
    %v110 = vand.u32 %v106, 65535
    %v111 = vshrl.u32 %v106, 16
    %v112 = vmul.u32 %v108, %v110
    %v113 = vmul.u32 %v108, %v111
    %v114 = vmul.u32 %v109, %v110
    %v115 = vmul.u32 %v109, %v111
    %v116 = vshll.u32 %v113, 16
    %v117 = vshrl.u32 %v113, 16
    %v118 = vshll.u32 %v114, 16
    %v119 = vshrl.u32 %v114, 16
    %vm120 = vc.u32 %v112, %v116
    %v121 = vsel %vm120, 1, 0
    %v122 = vadd.s32 %v112, %v116
    %v123 = vadd.s32 %v115, %v121
    %vm124 = vc.u32 %v122, %v118
    %v125 = vsel %vm124, 1, 0
    %v126 = vadd.s32 %v122, %v118
    %v127 = vadd.s32 %v123, %v125
    %v128 = vadd.s32 %v127, %v117
    %v129 = vadd.s32 %v128, %v119
    %v130 = vand.u32 %v107, 65535
    %v131 = vshrl.u32 %v107, 16
    %v132 = vand.u32 %v102, 65535
    %v133 = vshrl.u32 %v102, 16
    %v134 = vmul.u32 %v130, %v132
    %v135 = vmul.u32 %v130, %v133
    %v136 = vmul.u32 %v131, %v132
    %v137 = vmul.u32 %v131, %v133
    %v138 = vshll.u32 %v135, 16
    %v139 = vshrl.u32 %v135, 16
    %v140 = vshll.u32 %v136, 16
    %v141 = vshrl.u32 %v136, 16
    %vm142 = vc.u32 %v134, %v138
    %v143 = vsel %vm142, 1, 0
    %v144 = vadd.s32 %v134, %v138
    %v145 = vadd.s32 %v137, %v143
    %vm146 = vc.u32 %v144, %v140
    %v147 = vsel %vm146, 1, 0
    %v148 = vadd.s32 %v144, %v140
    %v149 = vadd.s32 %v145, %v147
    %v150 = vadd.s32 %v149, %v139
    %v151 = vadd.s32 %v150, %v141
    %v152 = vmul.u32 %v107, %v98
    %v153 = vadd.s32 %v129, %v148
    %vm154 = vc.u32 %v129, %v148
    %v155 = vadd.s32 %v151, 1
    %v156 = vsel %vm154, %v155, %v151
    %v157 = vadd.s32 %v152, %v156
    %v158 = vadd.s32 %v157, 536870912
    %v159 = vshrl.u32 %v158, 30
    %v160 = vshll.u32 %v159, 30
    %v161 = vsub.s32 %v157, %v160
    %vm162 = vcmp.lt.s32.totalorder %v161, 0
    %v163 = vsub.s32 0, %v161
    %v164 = vsel %vm162, %v163, %v161
    %v165 = vclz %v164
    %v166 = vsub.s32 %v165, 2
    %vm167 = vcmp.gt.s32.totalorder 0, %v166
    %v168 = vsel %vm167, 0, %v166
    %v169 = vsub.s32 32, %v168
    %v170 = vshll.u32 %v161, %v168
    %v171 = vshrl.u32 %v153, %v169
    %v172 = vor.u32 %v170, %v171
    %v173 = vsub.s32 4294967266, %v168
    %v174 = vadd.s32 %v173, 127
    %v175 = vshll.u32 %v174, 23
    %v176 = vor.u32 4788187, %v175
    %v177 = vand.u32 2147483647, %v176
    %v179 = vcvt.s32.f32 %v172
    %v180 = vmul.f32 %v179, %v177
    %v181 = vxor.u32 %v180, 2147483648
    %v182 = vsel %vm61, %v181, %v180
    %v183 = vsub.s32 4, %v159
    %v184 = vsel %vm61, %v183, %v159
    %v185 = vsel %vm60, %v57, %v182
    %v186 = vsel %vm60, 0, %v184
    %v187 = vmul.f32 %v185, %v185
    %v188 = vmul.f32 %v187, -0.001358992
    %v189 = vadd.f32 %v188, 0.041655596
    %v190 = vmul.f32 %v187, %v189
    %v191 = vadd.f32 %v190, -0.4999988
    %v192 = vmul.f32 %v187, %v191
    %v193 = vadd.f32 1.0, %v192
    %v194 = vmul.f32 %v185, %v185
    %v195 = vmul.f32 %v194, -0.00019511016
    %v196 = vadd.f32 %v195, 0.008332121
    %v197 = vmul.f32 %v194, %v196
    %v198 = vadd.f32 %v197, -0.16666654
    %v199 = vmul.f32 %v194, %v198
    %v200 = vadd.f32 %v199, 1.0
    %v201 = vmul.f32 %v200, %v185
    %vm202 = vweird.f32 %v57
    %v203 = vadd.s32 %v186, 3
    %v204 = vand.u32 %v203, 3
    %vm205 = vcmp.lt.s32.totalorder %v204, 2
    %vm206 = vcmp.eq.s32.totalorder %v204, 0
    %v207 = vxor.u32 %v201, 2147483648
    %v208 = vsel %vm206, %v193, %v207
    %vm209 = vcmp.eq.s32.totalorder %v204, 2
    %v210 = vxor.u32 %v193, 2147483648
    %v211 = vsel %vm209, %v210, %v201
    %v212 = vsel %vm205, %v208, %v211
    %v213 = vsel %vm202, nan, %v212
    %v214 = vand.u32 2147483647, %v58
    %vm215 = vcmp.le.f32.partialorder %v214, 0.7853982
    %vm216 = vcmp.lt.s32.totalorder %v58, 0
    %v217 = vand.u32 %v58, 2139095040
    %v218 = vshrl.u32 %v217, 23
    %v219 = vsub.s32 %v218, 127
    %v220 = vand.u32 2147483647, %v58
    %v221 = vand.u32 %v220, 8388607
    %v222 = vor.u32 %v221, 8388608
    %v223 = vsub.s32 0, %v222
    %v224 = vadd.s32 %v219, 1
    %vm225 = vcmp.gt.s32.totalorder %v224, 0
    %v226 = vsel %vm225, %v224, 0
    %v227 = vshrl.u32 %v226, 5
    %v228 = vand.u32 %v226, 31
    %v229 = vsub.s32 32, %v228
    %v230 = vshrl.u32 683565275, %v229
    %v231 = vshll.u32 683565275, %v228
    %v232 = vshrl.u32 2475754826, %v229
    %v233 = vor.u32 %v231, %v232
    %v234 = vshll.u32 2475754826, %v228
    %v235 = vshrl.u32 2131351028, %v229
    %v236 = vor.u32 %v234, %v235
    %v237 = vshll.u32 2131351028, %v228
    %v238 = vshrl.u32 2102212464, %v229
    %v239 = vor.u32 %v237, %v238
    %v240 = vshll.u32 2102212464, %v228
    %v241 = vshrl.u32 920167782, %v229
    %v242 = vor.u32 %v240, %v241
    %v243 = vshll.u32 920167782, %v228
    %v244 = vshrl.u32 1326507024, %v229
    %v245 = vor.u32 %v243, %v244
    %vm246 = vcmp.lt.s32.totalorder %v227, 1
    %vm247 = vcmp.lt.s32.totalorder %v227, 2
    %vm248 = vcmp.lt.s32.totalorder %v227, 3
    %vm249 = vcmp.lt.s32.totalorder %v227, 4
    %v250 = vsel %vm246, %v230, %v233
    %v251 = vsel %vm249, %v239, 2102212464
    %v252 = vsel %vm248, %v236, %v251
    %v253 = vsel %vm247, %v250, %v252
    %v254 = vsel %vm246, %v233, %v236
    %v255 = vsel %vm249, %v242, 920167782
    %v256 = vsel %vm248, %v239, %v255
    %v257 = vsel %vm247, %v254, %v256
    %v258 = vsel %vm246, %v236, %v239
    %v259 = vsel %vm249, %v245, 1326507024
    %v260 = vsel %vm248, %v242, %v259
    %v261 = vsel %vm247, %v258, %v260
    %v262 = vshll.u32 %v222, 8
    %v263 = vand.u32 %v262, 65535
    %v264 = vshrl.u32 %v262, 16
    %v265 = vand.u32 %v261, 65535
    %v266 = vshrl.u32 %v261, 16
    %v267 = vmul.u32 %v263, %v265
    %v268 = vmul.u32 %v263, %v266
    %v269 = vmul.u32 %v264, %v265
    %v270 = vmul.u32 %v264, %v266
    %v271 = vshll.u32 %v268, 16
    %v272 = vshrl.u32 %v268, 16
    %v273 = vshll.u32 %v269, 16
    %v274 = vshrl.u32 %v269, 16
    %vm275 = vc.u32 %v267, %v271
    %v276 = vsel %vm275, 1, 0
    %v277 = vadd.s32 %v267, %v271
    %v278 = vadd.s32 %v270, %v276
    %vm279 = vc.u32 %v277, %v273
    %v280 = vsel %vm279, 1, 0
    %v281 = vadd.s32 %v277, %v273
    %v282 = vadd.s32 %v278, %v280
    %v283 = vadd.s32 %v282, %v272
    %v284 = vadd.s32 %v283, %v274
    %v285 = vand.u32 %v262, 65535
    %v286 = vshrl.u32 %v262, 16
    %v287 = vand.u32 %v257, 65535
    %v288 = vshrl.u32 %v257, 16
    %v289 = vmul.u32 %v285, %v287
    %v290 = vmul.u32 %v285, %v288
    %v291 = vmul.u32 %v286, %v287
    %v292 = vmul.u32 %v286, %v288
    %v293 = vshll.u32 %v290, 16
    %v294 = vshrl.u32 %v290, 16
    %v295 = vshll.u32 %v291, 16
    %v296 = vshrl.u32 %v291, 16
    %vm297 = vc.u32 %v289, %v293
    %v298 = vsel %vm297, 1, 0
    %v299 = vadd.s32 %v289, %v293
    %v300 = vadd.s32 %v292, %v298
    %vm301 = vc.u32 %v299, %v295
    %v302 = vsel %vm301, 1, 0
    %v303 = vadd.s32 %v299, %v295
    %v304 = vadd.s32 %v300, %v302
    %v305 = vadd.s32 %v304, %v294
    %v306 = vadd.s32 %v305, %v296
    %v307 = vmul.u32 %v262, %v253
    %v308 = vadd.s32 %v284, %v303
    %vm309 = vc.u32 %v284, %v303
    %v310 = vadd.s32 %v306, 1
    %v311 = vsel %vm309, %v310, %v306
    %v312 = vadd.s32 %v307, %v311
    %v313 = vadd.s32 %v312, 536870912
    %v314 = vshrl.u32 %v313, 30
    %v315 = vshll.u32 %v314, 30
    %v316 = vsub.s32 %v312, %v315
    %vm317 = vcmp.lt.s32.totalorder %v316, 0
    %v318 = vsub.s32 0, %v316
    %v319 = vsel %vm317, %v318, %v316
    %v320 = vclz %v319
    %v321 = vsub.s32 %v320, 2
    %vm322 = vcmp.gt.s32.totalorder 0, %v321
    %v323 = vsel %vm322, 0, %v321
    %v324 = vsub.s32 32, %v323
    %v325 = vshll.u32 %v316, %v323
    %v326 = vshrl.u32 %v308, %v324
    %v327 = vor.u32 %v325, %v326
    %v328 = vsub.s32 4294967266, %v323
    %v329 = vadd.s32 %v328, 127
    %v330 = vshll.u32 %v329, 23
    %v331 = vor.u32 4788187, %v330
    %v332 = vand.u32 2147483647, %v331
    %v334 = vcvt.s32.f32 %v327
    %v335 = vmul.f32 %v334, %v332
    %v336 = vxor.u32 %v335, 2147483648
    %v337 = vsel %vm216, %v336, %v335
    %v338 = vsub.s32 4, %v314
    %v339 = vsel %vm216, %v338, %v314
    %v340 = vsel %vm215, %v58, %v337
    %v341 = vsel %vm215, 0, %v339
    %v342 = vmul.f32 %v340, %v340
    %v343 = vmul.f32 %v342, -0.001358992
    %v344 = vadd.f32 %v343, 0.041655596
    %v345 = vmul.f32 %v342, %v344
    %v346 = vadd.f32 %v345, -0.4999988
    %v347 = vmul.f32 %v342, %v346
    %v348 = vadd.f32 1.0, %v347
    %v349 = vmul.f32 %v340, %v340
    %v350 = vmul.f32 %v349, -0.00019511016
    %v351 = vadd.f32 %v350, 0.008332121
    %v352 = vmul.f32 %v349, %v351
    %v353 = vadd.f32 %v352, -0.16666654
    %v354 = vmul.f32 %v349, %v353
    %v355 = vadd.f32 %v354, 1.0
    %v356 = vmul.f32 %v355, %v340
    %vm357 = vweird.f32 %v58
    %v358 = vadd.s32 %v341, 3
    %v359 = vand.u32 %v358, 3
    %vm360 = vcmp.lt.s32.totalorder %v359, 2
    %vm361 = vcmp.eq.s32.totalorder %v359, 0
    %v362 = vxor.u32 %v356, 2147483648
    %v363 = vsel %vm361, %v348, %v362
    %vm364 = vcmp.eq.s32.totalorder %v359, 2
    %v365 = vxor.u32 %v348, 2147483648
    %v366 = vsel %vm364, %v365, %v356
    %v367 = vsel %vm360, %v363, %v366
    %v368 = vsel %vm357, nan, %v367
    %v371 = vrot.slane %v368, 4
    %vm372 = vcmask 1043456
    %v373 = vsel %vm372, %v213, %v371
    %375 = vst [vmem:[#allocation5] sm:$0xff] %v373
    // Predicated region
    $region10: #{tpu_custom_call.1} parent=1 // pred_check
      _
    $region11: #{tpu_custom_call.1} parent=1 // pred_check_branch
      %377 = sbr.rel (0) target = $region13
    $region12: #{tpu_custom_call.1} parent=1 // pred_region
      %379 = vsyncadd [#allocation4], 0
      %s381 = sshll.u32 [#allocation5], 4
      %s382 = int_to_ptr.vmem [resolvable:$true] %s381
      %s383 = sshll.u32 %s1, 4
      %s384 = int_to_ptr.hbm [resolvable:$true] %s383
      %386 = dma.vmem_to_hbm [thread:$0]  %s382, 128, %s384, [#allocation4]
    $region13: #{tpu_custom_call.1} parent=1 // pred_fallthru
      _
    // Predicated region
    $region14: #{tpu_custom_call.1} parent=1 // pred_check
      _
    $region15: #{tpu_custom_call.1} parent=1 // pred_check_branch
      %388 = sbr.rel (0) target = $region17
    $region16: #{tpu_custom_call.1} parent=1 // pred_region
      %390 = dma.done [#allocation4], 128
    $region17: #{tpu_custom_call.1} parent=1 // pred_fallthru
      _
    %391 = vsyncpa [#allocation3], 1
    %392 = vsyncpa [#allocation4], 1

</llo_original>
